<compile_context>
chip_gen: v5e
topology: v5e:2x2
jax: 0.10.0
libtpu: 0.0.40
codegen_flags: <defaults>
</compile_context>

<pallas_src>
import jax
import jax.numpy as jnp
from jax.experimental import pallas as pl
from jax.experimental.pallas import tpu as pltpu


_LANES = 2048        # lane width of the 2-D slab (multiple of 128)
_BLOCK_ROWS = 256    # sublane rows per block -> 256 * 2048 * 4B = 2 MiB (f32)


def _noise_ceiling_kernel(params_ref, x_ref, o_ref):
    """params_ref: SMEM (2,) f32 = [slope, intercept]; x_ref/o_ref: (block_r, lanes)."""
    slope = params_ref[0]
    intercept = params_ref[1]
    x = x_ref[...].astype(jnp.float32)
    o_ref[...] = (slope * x + intercept).astype(o_ref.dtype)


def noise_ceiling_forward(inputs, slope=1.0, intercept=0.0):
    """JAX/Pallas equivalent of NoiseCeiling.forward.

    inputs: array of shape (..., 2) (last dim holds the two split halves).
    returns: array of shape (...,) == slope * inputs[..., 0] + intercept
    """
    out_shape = inputs.shape[:-1]
    dtype = inputs.dtype

    # Select the first split-half in the wrapper so the kernel pipeline only
    # streams the bytes it actually uses, then flatten.
    x0 = jnp.reshape(inputs[..., 0], (-1,))
    m = x0.shape[0]

    # Lane width: a multiple of 128, capped at _LANES.  Only a small tail pad
    # (< lanes elements) is needed; it fuses with the slice above in XLA.
    lanes = min(_LANES, pl.cdiv(m, 128) * 128)
    rows = pl.cdiv(m, lanes)
    padded = rows * lanes
    if padded != m:
        x0 = jnp.pad(x0, (0, padded - m))
    x2 = x0.reshape(rows, lanes)

    # Block: full rows if small, else 256 sublane rows (ragged last block is
    # handled by Pallas -- OOB writes are discarded).
    block_rows = rows if rows < _BLOCK_ROWS else _BLOCK_ROWS
    grid = (pl.cdiv(rows, block_rows),)

    # Parameters stay float32 (matches PyTorch parameter precision).
    params = jnp.asarray([slope, intercept], dtype=jnp.float32)

    out = pl.pallas_call(
        _noise_ceiling_kernel,
        out_shape=jax.ShapeDtypeStruct((rows, lanes), dtype),
        grid=grid,
        in_specs=[
            pl.BlockSpec(memory_space=pltpu.MemorySpace.SMEM),    # scalar params
            pl.BlockSpec((block_rows, lanes), lambda i: (i, 0)),  # data slab
        ],
        out_specs=pl.BlockSpec((block_rows, lanes), lambda i: (i, 0)),
        compiler_params=pltpu.CompilerParams(
            dimension_semantics=("parallel",),
            vmem_limit_bytes=32 * 1024 * 1024,
        ),
    )(params, x2)

    return out.reshape(-1)[:m].reshape(out_shape)


if __name__ == "__main__":
    key = jax.random.PRNGKey(0)
    # inputs: (voxels, stimuli, spatial, 2) style tensor; last dim = the two
    # data halves (what .select(-1, 0) indexes).
    x = jax.random.normal(key, (2, 4, 16, 2), dtype=jnp.float32)

    # Module defaults are slope=1, intercept=0; use non-trivial values so the
    # affine compute is actually exercised.
    slope, intercept = 0.5, 0.25

    y = noise_ceiling_forward(x, slope=slope, intercept=intercept)
    y = jax.block_until_ready(y)

    # reference check
    y_ref = slope * x[..., 0] + intercept
    assert y.shape == x.shape[:-1], (y.shape, x.shape)
    assert jnp.allclose(y, y_ref, atol=1e-6, rtol=1e-6), float(
        jnp.max(jnp.abs(y - y_ref))
    )

    print("KERNEL_OK")
</pallas_src>

<mosaic_0001>
module attributes {stable_mosaic.version = 11 : i64} {
  func.func @_noise_ceiling_kernel(%arg0: i32, %arg1: memref<2xf32, #tpu.memory_space<smem>>, %arg2: memref<1x128xf32, #tpu.memory_space<vmem>>, %arg3: memref<1x128xf32, #tpu.memory_space<vmem>>) attributes {dimension_semantics = [#tpu.dimension_semantics<parallel>], iteration_bounds = array<i64: 1>, scalar_prefetch = 0 : i64, scratch_operands = 0 : i64, tpu.core_type = #tpu.core_type<tc>, window_params = [{transform_indices = @transform_0, window_bounds = array<i64: 2>}, {transform_indices = @transform_1, window_bounds = array<i64: 1, 128>}, {transform_indices = @transform_2, window_bounds = array<i64: 1, 128>}]} {
    %c0 = arith.constant 0 : index
    %0 = memref.load %arg1[%c0] : memref<2xf32, #tpu.memory_space<smem>>
    %c1 = arith.constant 1 : index
    %1 = memref.load %arg1[%c1] : memref<2xf32, #tpu.memory_space<smem>>
    %c0_0 = arith.constant 0 : index
    %c0_1 = arith.constant 0 : index
    %2 = vector.load %arg2[%c0_0, %c0_1] : memref<1x128xf32, #tpu.memory_space<vmem>>, vector<1x128xf32>
    %3 = vector.broadcast %0 : f32 to vector<1x128xf32>
    %4 = arith.mulf %3, %2 : vector<1x128xf32>
    %5 = vector.broadcast %1 : f32 to vector<1x128xf32>
    %6 = arith.addf %4, %5 : vector<1x128xf32>
    %c0_2 = arith.constant 0 : index
    %c0_3 = arith.constant 0 : index
    %7 = vector.load %arg3[%c0_2, %c0_3] : memref<1x128xf32, #tpu.memory_space<vmem>>, vector<1x128xf32>
    tpu.vector_store %arg3[%c0_2, %c0_3], %6 {strides = array<i32>} : memref<1x128xf32, #tpu.memory_space<vmem>>, vector<1x128xf32>,
    return
  }
  func.func @transform_0(%arg0: i32) -> i32 {
    %c0_i32 = arith.constant 0 : i32
    %c0_i32_0 = arith.constant 0 : i32
    return %c0_i32 : i32
  }
  func.func @transform_1(%arg0: i32) -> (i32, i32) {
    %c0_i32 = arith.constant 0 : i32
    %c0_i32_0 = arith.constant 0 : i32
    return %arg0, %c0_i32 : i32, i32
  }
  func.func @transform_2(%arg0: i32) -> (i32, i32) {
    %c0_i32 = arith.constant 0 : i32
    %c0_i32_0 = arith.constant 0 : i32
    return %arg0, %c0_i32 : i32, i32
  }
}

</mosaic_0001>

<llo_original>
// kernel: tpu_custom_call.1
$region0: #{tpu_custom_call.1}
  #allocation0 [shape = 'u32[]', space=smem, size = 0x4, offset = 0x4, fixed_abs, tag = 'smem constant byte address 0x4 - core index']
  #allocation1 [shape = 'u32[72,128]{1,0:T(1,128)}', space=vmem, size = 0x9000, scoped, tag = 'internal scratch']
  %s0 = inlined_call_operand.hbm [shape: f32[2], index: 0, kind: input, shape index: {}]
  %s1 = inlined_call_operand.hbm [shape: f32[1,128], index: 1, kind: input, shape index: {}]
  %s2 = inlined_call_operand.hbm [shape: f32[1,128], index: 2, kind: output, shape index: {}]
  %s3 = sld [smem:[#allocation0]]
  $region26: #{tpu_custom_call.1} parent=0
    _
  %s5 = ssub.s32 1, %s3
  %s6 = scalar_select 0, %s5, %s3
  $region1: #{tpu_custom_call.1} parent=0
    #allocation2 [shape = 'u8[512]{0}', space=smem, size = 0x200, scoped, tag = 'input window, operand 0, single buffered']
    #allocation3 [shape = 's32[1]{0}', space=sflag, size = 0x4, scoped, tag = 'scoped memory for tpu_custom_call.1']
    #allocation4 [shape = 's32[1]{0}', space=sflag, size = 0x4, scoped, tag = 'scoped memory for tpu_custom_call.1']
    #allocation5 [shape = 's32[1]{0}', space=sflag, size = 0x4, scoped, tag = 'scoped memory for tpu_custom_call.1']
    #allocation6 [shape = 'u8[512]{0}', space=vmem, size = 0x400, scoped, tag = 'input window, operand 1, single buffered']
    #allocation7 [shape = 'u8[512]{0}', space=vmem, size = 0x400, scoped, tag = 'output window, operand 0, single buffered']
    %7 = vsyncpa [#allocation5], 0
    %8 = vsyncpa [#allocation3], 0
    %9 = vsyncpa [#allocation4], 0
    // Predicated region
    $region2: #{tpu_custom_call.1} parent=1 // pred_check
      _
    $region3: #{tpu_custom_call.1} parent=1 // pred_check_branch
      %11 = sbr.rel (0) target = $region5
    $region4: #{tpu_custom_call.1} parent=1 // pred_region
      %13 = vsyncadd [#allocation5], 0
      %s15 = sshll.u32 %s0, 4
      %s16 = int_to_ptr.hbm [resolvable:$true] %s15
      %18 = dma.hbm_to_smem %s16, 16, [#allocation2], [#allocation5]
    $region5: #{tpu_custom_call.1} parent=1 // pred_fallthru
      _
    // Predicated region
    $region6: #{tpu_custom_call.1} parent=1 // pred_check
      _
    $region7: #{tpu_custom_call.1} parent=1 // pred_check_branch
      %20 = sbr.rel (0) target = $region9
    $region8: #{tpu_custom_call.1} parent=1 // pred_region
      %22 = vsyncadd [#allocation3], 0
      %s24 = sshll.u32 %s1, 4
      %s25 = int_to_ptr.hbm [resolvable:$true] %s24
      %s26 = sshll.u32 [#allocation6], 4
      %s27 = int_to_ptr.vmem [resolvable:$true] %s26
      %29 = dma.hbm_to_vmem [thread:$0]  %s25, 16, %s27, [#allocation3]
    $region9: #{tpu_custom_call.1} parent=1 // pred_fallthru
      _
    // Predicated region
    $region10: #{tpu_custom_call.1} parent=1 // pred_check
      _
    $region11: #{tpu_custom_call.1} parent=1 // pred_check_branch
      %31 = sbr.rel (0) target = $region13
    $region12: #{tpu_custom_call.1} parent=1 // pred_region
      %33 = dma.done [#allocation5], 16
    $region13: #{tpu_custom_call.1} parent=1 // pred_fallthru
      _
    // Predicated region
    $region14: #{tpu_custom_call.1} parent=1 // pred_check
      _
    $region15: #{tpu_custom_call.1} parent=1 // pred_check_branch
      %35 = sbr.rel (0) target = $region17
    $region16: #{tpu_custom_call.1} parent=1 // pred_region
      %37 = dma.done [#allocation3], 16
    $region17: #{tpu_custom_call.1} parent=1 // pred_fallthru
      _
    %38 = sfence
    %s39 = sld [smem:[#allocation2]]
    %s40 = sld [smem:[#allocation2 + $0x1]]
    %v41 = vld [vmem:[#allocation6] sm:$0x1]
    %v42 = vstv %s39
    %v43 = vmul.f32 %v42, %v41
    %v44 = vstv %s40
    %v45 = vadd.f32 %v43, %v44
    %46 = vst [vmem:[#allocation7] sm:$0x1] %v45
    // Predicated region
    $region18: #{tpu_custom_call.1} parent=1 // pred_check
      _
    $region19: #{tpu_custom_call.1} parent=1 // pred_check_branch
      %48 = sbr.rel (0) target = $region21
    $region20: #{tpu_custom_call.1} parent=1 // pred_region
      %50 = vsyncadd [#allocation4], 0
      %s52 = sshll.u32 [#allocation7], 4
      %s53 = int_to_ptr.vmem [resolvable:$true] %s52
      %s54 = sshll.u32 %s2, 4
      %s55 = int_to_ptr.hbm [resolvable:$true] %s54
      %57 = dma.vmem_to_hbm [thread:$0]  %s53, 16, %s55, [#allocation4]
    $region21: #{tpu_custom_call.1} parent=1 // pred_fallthru
      _
    // Predicated region
    $region22: #{tpu_custom_call.1} parent=1 // pred_check
      _
    $region23: #{tpu_custom_call.1} parent=1 // pred_check_branch
      %59 = sbr.rel (0) target = $region25
    $region24: #{tpu_custom_call.1} parent=1 // pred_region
      %61 = dma.done [#allocation4], 16
    $region25: #{tpu_custom_call.1} parent=1 // pred_fallthru
      _
    %62 = vsyncpa [#allocation3], 1
    %63 = vsyncpa [#allocation4], 1
    %64 = vsyncpa [#allocation5], 1

</llo_original>
